<compile_context>
chip_gen: v5e
topology: v5e:2x2
jax: 0.10.0
libtpu: 0.0.40
codegen_flags: <defaults>
</compile_context>

<pallas_src>
import functools
import math

import jax
import jax.numpy as jnp
from jax.experimental import pallas as pl
from jax.experimental.pallas import tpu as pltpu

_LOG_2PI = math.log(2.0 * math.pi)
_OUT_LANES = 128          # lane-dense output slab width (A+1 useful lanes)


def _round_up(x, m):
    return ((x + m - 1) // m) * m


def _choose_tile_b(B, tile_cap):
    """Batch tile: as large as possible (kernel is overhead-bound), a multiple
    of 8, and — once the batch is large — an even number of grid steps so
    v7x's two TensorCores both get work (harmless on v5e/v6e)."""
    B8 = _round_up(B, 8)
    if B8 <= tile_cap:
        if B8 >= 1024:
            return _round_up(B8 // 2, 8)   # grid of 2 for v7x megacore
        return B8                          # tiny batch: single grid step
    n = pl.cdiv(B8, tile_cap)
    n += n % 2                             # even grid length
    return _round_up(pl.cdiv(B8, n), 8)


def actor_sac_kernel(x_ref, eps_ref, w1_ref, b1_ref, w2_ref, b2_ref,
                     wh_ref, bh_ref, out_ref, *,
                     A, min_log_std, max_log_std, max_action,
                     evaluate, with_logprob, use_bf16):
    cdt = jnp.bfloat16 if use_bf16 else jnp.float32

    x = x_ref[...].astype(cdt)             # (TILE_B, n_states)
    eps = eps_ref[...]                     # (TILE_B, A), stays f32

    # feature trunk: Linear -> ReLU -> Linear -> ReLU   (MXU + VPU)
    f = jnp.dot(x, w1_ref[...].astype(cdt),
                preferred_element_type=jnp.float32) + b1_ref[...]
    f = jnp.maximum(f, 0.0)
    f = jnp.dot(f.astype(cdt), w2_ref[...].astype(cdt),
                preferred_element_type=jnp.float32) + b2_ref[...]
    f = jnp.maximum(f, 0.0)

    # fused head: one matmul producing [mu | log_std]   (single MXU push)
    head = jnp.dot(f.astype(cdt), wh_ref[...].astype(cdt),
                   preferred_element_type=jnp.float32) + bh_ref[...]
    mu = head[:, :A]
    log_std = jnp.clip(head[:, A:], min_log_std, max_log_std)

    if evaluate:
        pre_tanh = mu                      # deterministic action
    else:
        pre_tanh = mu + jnp.exp(log_std) * eps   # reparameterized sample (EUP)
    action = jnp.tanh(pre_tanh)            # EUP
    out_action = action if max_action is None else max_action * action

    # Lane-dense output slab: zero-fill with dense stores, then write the
    # action / log_prob regions directly — no in-kernel concatenate.
    out_ref[...] = jnp.zeros_like(out_ref)
    out_ref[:, :A] = out_action

    if with_logprob:
        # Normal(mu, std).log_prob(z) with z = mu + std*eps:
        #   -0.5*eps^2 - log_std - 0.5*log(2*pi).
        # The tanh correction uses the (unscaled) action — this matches the
        # reference even for evaluate=True (action = tanh(mu), z eps-based).
        logp = -0.5 * (eps * eps) - log_std - 0.5 * _LOG_2PI
        logp = logp - jnp.log(1.0 - action * action + 1e-7)
        out_ref[:, A:A + 1] = jnp.sum(logp, axis=-1, keepdims=True)  # XLU reduce


def pack_params(params):
    """One-time packing (call when parameters are created/updated, NOT per
    forward step): fuses the mu / log_std heads into a single (H, 2A) weight
    and (1, 2A) bias so the kernel issues one head matmul and never slices a
    parameter ref on a non-128-aligned lane boundary."""
    return {
        "w1": params["w1"], "b1": params["b1"],
        "w2": params["w2"], "b2": params["b2"],
        "w_head": jnp.concatenate([params["w_mu"], params["w_ls"]], axis=1),
        "b_head": jnp.concatenate([params["b_mu"], params["b_ls"]], axis=1),
    }


def actor_sac_forward(state, eps, packed, *, min_log_std, max_log_std,
                      max_action=None, evaluate=False, with_logprob=True,
                      tile_cap=2048, use_bf16=False):
    """state: (B, n_states) f32; eps: (B, n_actions) f32 standard-normal noise.
    `packed` comes from pack_params()."""
    B, n_states = state.shape
    H = packed["w1"].shape[1]
    A = packed["w_head"].shape[1] // 2

    TILE_B = _choose_tile_b(B, int(tile_cap))
    B_pad = _round_up(B, TILE_B)
    if B_pad != B:
        state = jnp.pad(state, ((0, B_pad - B), (0, 0)))
        eps = jnp.pad(eps, ((0, B_pad - B), (0, 0)))
    grid = (B_pad // TILE_B,)

    kernel = functools.partial(
        actor_sac_kernel, A=A,
        min_log_std=float(min_log_std), max_log_std=float(max_log_std),
        max_action=None if max_action is None else float(max_action),
        evaluate=bool(evaluate), with_logprob=bool(with_logprob),
        use_bf16=bool(use_bf16))

    flops = 2 * B_pad * (n_states * H + H * H + H * 2 * A) + 16 * B_pad * A
    n_trans = (1 if evaluate else 2) + (1 if with_logprob else 0)  # tanh/exp/log
    transcendentals = n_trans * B_pad * A
    bytes_accessed = 4 * (state.size + eps.size + packed["w1"].size
                          + packed["w2"].size + packed["w_head"].size
                          + 2 * H + 2 * A + B_pad * _OUT_LANES)

    out = pl.pallas_call(
        kernel,
        out_shape=jax.ShapeDtypeStruct((B_pad, _OUT_LANES), jnp.float32),
        grid_spec=pltpu.PrefetchScalarGridSpec(
            num_scalar_prefetch=0,
            grid=grid,
            in_specs=[
                pl.BlockSpec((TILE_B, n_states), lambda i: (i, 0)),   # state
                pl.BlockSpec((TILE_B, A), lambda i: (i, 0)),          # eps
                pl.BlockSpec((n_states, H), lambda i: (0, 0)),        # w1
                pl.BlockSpec((1, H), lambda i: (0, 0)),               # b1
                pl.BlockSpec((H, H), lambda i: (0, 0)),               # w2
                pl.BlockSpec((1, H), lambda i: (0, 0)),               # b2
                pl.BlockSpec((H, 2 * A), lambda i: (0, 0)),           # [w_mu|w_ls]
                pl.BlockSpec((1, 2 * A), lambda i: (0, 0)),           # [b_mu|b_ls]
            ],
            out_specs=pl.BlockSpec((TILE_B, _OUT_LANES), lambda i: (i, 0)),
        ),
        compiler_params=pltpu.CompilerParams(
            dimension_semantics=("parallel",),
        ),
        cost_estimate=pl.CostEstimate(
            flops=int(flops),
            transcendentals=int(transcendentals),
            bytes_accessed=int(bytes_accessed),
        ),
    )(state, eps, packed["w1"], packed["b1"], packed["w2"], packed["b2"],
      packed["w_head"], packed["b_head"])

    action = out[:B, :A]
    log_prob = out[:B, A:A + 1] if with_logprob else None
    return action, log_prob


def init_params(key, n_states, n_actions, hidden_units):
    """Deterministic synthetic init (stands in for reset_parameters)."""
    H = hidden_units
    shapes = {
        "w1": (n_states, H), "b1": (1, H),
        "w2": (H, H),        "b2": (1, H),
        "w_mu": (H, n_actions), "b_mu": (1, n_actions),
        "w_ls": (H, n_actions), "b_ls": (1, n_actions),
    }
    params = {}
    keys = jax.random.split(key, len(shapes))
    for k, (name, shp) in zip(keys, shapes.items()):
        scale = 0.5 / (float(shp[0]) ** 0.5) if name.startswith("w") else 0.05
        params[name] = scale * jax.random.normal(k, shp, dtype=jnp.float32)
    return params


def reference_forward(state, eps, p, *, min_log_std, max_log_std,
                      max_action=None, evaluate=False, with_logprob=True):
    """Pure-JAX mirror of ActorSAC.forward for correctness checking."""
    f = jax.nn.relu(state @ p["w1"] + p["b1"])
    f = jax.nn.relu(f @ p["w2"] + p["b2"])
    mu = f @ p["w_mu"] + p["b_mu"]
    log_std = jnp.clip(f @ p["w_ls"] + p["b_ls"], min_log_std, max_log_std)
    std = jnp.exp(log_std)
    z = mu + std * eps
    action = jnp.tanh(mu) if evaluate else jnp.tanh(z)
    if with_logprob:
        logp = (-0.5 * jnp.square((z - mu) / std) - log_std
                - 0.5 * jnp.log(2.0 * jnp.pi))
        logp = logp - jnp.log(1.0 - jnp.square(action) + 1e-7)
        logp = jnp.sum(logp, axis=-1, keepdims=True)
    else:
        logp = None
    if max_action is not None:
        action = max_action * action
    return action, logp


if __name__ == "__main__":
    # Small shapes consistent with the module's forward.
    B, n_states, n_actions, hidden_units = 8, 16, 4, 32
    min_log_std, max_log_std = -20.0, 2.0
    max_action = 2.0
    cfg = dict(min_log_std=min_log_std, max_log_std=max_log_std)

    key = jax.random.PRNGKey(0)
    k_x, k_e, k_p, k_x2, k_e2 = jax.random.split(key, 5)
    state = jax.random.normal(k_x, (B, n_states), dtype=jnp.float32)
    eps = jax.random.normal(k_e, (B, n_actions), dtype=jnp.float32)
    params = init_params(k_p, n_states, n_actions, hidden_units)
    packed = pack_params(params)   # one-time packing, outside the step

    # 1) default path: stochastic action + log_prob, scaled by max_action
    action, log_prob = actor_sac_forward(
        state, eps, packed, max_action=max_action,
        evaluate=False, with_logprob=True, **cfg)
    action = jax.block_until_ready(action)
    log_prob = jax.block_until_ready(log_prob)
    ref_a, ref_lp = reference_forward(
        state, eps, params, max_action=max_action,
        evaluate=False, with_logprob=True, **cfg)
    assert action.shape == (B, n_actions)
    assert log_prob.shape == (B, 1)
    assert jnp.allclose(action, ref_a, atol=1e-5, rtol=1e-5), "action mismatch"
    # log(1 - tanh^2 + 1e-7) amplifies ULP-level tanh differences.
    assert jnp.allclose(log_prob, ref_lp, atol=1e-3, rtol=1e-3), "log_prob mismatch"

    # 2) multi-tile path with batch padding (grid length >= 2, even)
    B2 = 200
    state2 = jax.random.normal(k_x2, (B2, n_states), dtype=jnp.float32)
    eps2 = jax.random.normal(k_e2, (B2, n_actions), dtype=jnp.float32)
    a2, lp2 = actor_sac_forward(
        state2, eps2, packed, max_action=max_action,
        evaluate=False, with_logprob=True, tile_cap=64, **cfg)
    a2 = jax.block_until_ready(a2)
    lp2 = jax.block_until_ready(lp2)
    ref_a2, ref_lp2 = reference_forward(
        state2, eps2, params, max_action=max_action,
        evaluate=False, with_logprob=True, **cfg)
    assert a2.shape == (B2, n_actions) and lp2.shape == (B2, 1)
    assert jnp.allclose(a2, ref_a2, atol=1e-4, rtol=1e-4), "tiled action mismatch"
    assert jnp.allclose(lp2, ref_lp2, atol=2e-3, rtol=1e-3), "tiled log_prob mismatch"

    # 3) evaluate=True, with_logprob=False, max_action=None
    a3, lp3 = actor_sac_forward(
        state, eps, packed, max_action=None,
        evaluate=True, with_logprob=False, **cfg)
    a3 = jax.block_until_ready(a3)
    ref_a3, _ = reference_forward(
        state, eps, params, max_action=None,
        evaluate=True, with_logprob=False, **cfg)
    assert lp3 is None
    assert jnp.allclose(a3, ref_a3, atol=1e-5, rtol=1e-5), "eval action mismatch"

    # 4) optional bf16-matmul path (secondary perf knob): loose sanity check
    a4, lp4 = actor_sac_forward(
        state, eps, packed, max_action=max_action,
        evaluate=False, with_logprob=True, use_bf16=True, **cfg)
    a4 = jax.block_until_ready(a4)
    lp4 = jax.block_until_ready(lp4)
    assert jnp.allclose(a4, ref_a, atol=5e-2, rtol=5e-2), "bf16 action mismatch"
    assert bool(jnp.all(jnp.isfinite(lp4))), "bf16 log_prob not finite"

    print("KERNEL_OK")
</pallas_src>

<mosaic_0001>
module attributes {stable_mosaic.version = 11 : i64} {
  func.func @actor_sac_kernel(%arg0: i32, %arg1: memref<8x16xf32, #tpu.memory_space<vmem>>, %arg2: memref<8x4xf32, #tpu.memory_space<vmem>>, %arg3: memref<16x32xf32, #tpu.memory_space<vmem>>, %arg4: memref<1x32xf32, #tpu.memory_space<vmem>>, %arg5: memref<32x32xf32, #tpu.memory_space<vmem>>, %arg6: memref<1x32xf32, #tpu.memory_space<vmem>>, %arg7: memref<32x8xf32, #tpu.memory_space<vmem>>, %arg8: memref<1x8xf32, #tpu.memory_space<vmem>>, %arg9: memref<8x128xf32, #tpu.memory_space<vmem>>) attributes {dimension_semantics = [#tpu.dimension_semantics<parallel>], iteration_bounds = array<i64: 1>, scalar_prefetch = 0 : i64, scratch_operands = 0 : i64, tpu.core_type = #tpu.core_type<tc>, window_params = [{transform_indices = @transform_0, window_bounds = array<i64: 8, 16>}, {transform_indices = @transform_1, window_bounds = array<i64: 8, 4>}, {pipeline_mode = #tpu.pipeline_mode<synchronous>, transform_indices = @transform_2, window_bounds = array<i64: 16, 32>}, {pipeline_mode = #tpu.pipeline_mode<synchronous>, transform_indices = @transform_3, window_bounds = array<i64: 1, 32>}, {pipeline_mode = #tpu.pipeline_mode<synchronous>, transform_indices = @transform_4, window_bounds = array<i64: 32, 32>}, {pipeline_mode = #tpu.pipeline_mode<synchronous>, transform_indices = @transform_5, window_bounds = array<i64: 1, 32>}, {pipeline_mode = #tpu.pipeline_mode<synchronous>, transform_indices = @transform_6, window_bounds = array<i64: 32, 8>}, {pipeline_mode = #tpu.pipeline_mode<synchronous>, transform_indices = @transform_7, window_bounds = array<i64: 1, 8>}, {transform_indices = @transform_8, window_bounds = array<i64: 8, 128>}]} {
    %c0 = arith.constant 0 : index
    %c0_0 = arith.constant 0 : index
    %0 = vector.load %arg1[%c0, %c0_0] : memref<8x16xf32, #tpu.memory_space<vmem>>, vector<8x16xf32>
    %c0_1 = arith.constant 0 : index
    %c0_2 = arith.constant 0 : index
    %1 = vector.load %arg2[%c0_1, %c0_2] : memref<8x4xf32, #tpu.memory_space<vmem>>, vector<8x4xf32>
    %c0_3 = arith.constant 0 : index
    %c0_4 = arith.constant 0 : index
    %2 = vector.load %arg3[%c0_3, %c0_4] : memref<16x32xf32, #tpu.memory_space<vmem>>, vector<16x32xf32>
    %cst = arith.constant dense<0.000000e+00> : vector<8x32xf32>
    %3 = tpu.matmul %0, %2, %cst {dimension_numbers = #tpu.dot_dimension_numbers<[1], [0], [0], [1], [0, 0, 1, 1], [], []>} : vector<8x16xf32>, vector<16x32xf32>, vector<8x32xf32> -> vector<8x32xf32>
    %c0_5 = arith.constant 0 : index
    %c0_6 = arith.constant 0 : index
    %4 = vector.load %arg4[%c0_5, %c0_6] : memref<1x32xf32, #tpu.memory_space<vmem>>, vector<1x32xf32>
    %5 = vector.broadcast %4 : vector<1x32xf32> to vector<8x32xf32>
    %6 = arith.addf %3, %5 : vector<8x32xf32>
    %cst_7 = arith.constant 0.000000e+00 : f32
    %7 = vector.broadcast %cst_7 : f32 to vector<8x32xf32>
    %8 = arith.maximumf %6, %7 : vector<8x32xf32>
    %c0_8 = arith.constant 0 : index
    %c0_9 = arith.constant 0 : index
    %9 = vector.load %arg5[%c0_8, %c0_9] : memref<32x32xf32, #tpu.memory_space<vmem>>, vector<32x32xf32>
    %cst_10 = arith.constant dense<0.000000e+00> : vector<8x32xf32>
    %10 = tpu.matmul %8, %9, %cst_10 {dimension_numbers = #tpu.dot_dimension_numbers<[1], [0], [0], [1], [0, 0, 1, 1], [], []>} : vector<8x32xf32>, vector<32x32xf32>, vector<8x32xf32> -> vector<8x32xf32>
    %c0_11 = arith.constant 0 : index
    %c0_12 = arith.constant 0 : index
    %11 = vector.load %arg6[%c0_11, %c0_12] : memref<1x32xf32, #tpu.memory_space<vmem>>, vector<1x32xf32>
    %12 = vector.broadcast %11 : vector<1x32xf32> to vector<8x32xf32>
    %13 = arith.addf %10, %12 : vector<8x32xf32>
    %cst_13 = arith.constant 0.000000e+00 : f32
    %14 = vector.broadcast %cst_13 : f32 to vector<8x32xf32>
    %15 = arith.maximumf %13, %14 : vector<8x32xf32>
    %c0_14 = arith.constant 0 : index
    %c0_15 = arith.constant 0 : index
    %16 = vector.load %arg7[%c0_14, %c0_15] : memref<32x8xf32, #tpu.memory_space<vmem>>, vector<32x8xf32>
    %cst_16 = arith.constant dense<0.000000e+00> : vector<8x8xf32>
    %17 = tpu.matmul %15, %16, %cst_16 {dimension_numbers = #tpu.dot_dimension_numbers<[1], [0], [0], [1], [0, 0, 1, 1], [], []>} : vector<8x32xf32>, vector<32x8xf32>, vector<8x8xf32> -> vector<8x8xf32>
    %c0_17 = arith.constant 0 : index
    %c0_18 = arith.constant 0 : index
    %18 = vector.load %arg8[%c0_17, %c0_18] : memref<1x8xf32, #tpu.memory_space<vmem>>, vector<1x8xf32>
    %19 = vector.broadcast %18 : vector<1x8xf32> to vector<8x8xf32>
    %20 = arith.addf %17, %19 : vector<8x8xf32>
    %21 = vector.extract_strided_slice %20 {offsets = [0, 0], sizes = [8, 4], strides = [1, 1]} : vector<8x8xf32> to vector<8x4xf32>
    %22 = vector.extract_strided_slice %20 {offsets = [0, 4], sizes = [8, 4], strides = [1, 1]} : vector<8x8xf32> to vector<8x4xf32>
    %cst_19 = arith.constant -2.000000e+01 : f32
    %cst_20 = arith.constant 2.000000e+00 : f32
    %23 = vector.broadcast %cst_19 : f32 to vector<8x4xf32>
    %24 = arith.maximumf %23, %22 : vector<8x4xf32>
    %25 = vector.broadcast %cst_20 : f32 to vector<8x4xf32>
    %26 = arith.minimumf %25, %24 : vector<8x4xf32>
    %27 = math.exp %26 : vector<8x4xf32>
    %28 = arith.mulf %27, %1 : vector<8x4xf32>
    %29 = arith.addf %21, %28 : vector<8x4xf32>
    %30 = math.tanh %29 : vector<8x4xf32>
    %cst_21 = arith.constant 2.000000e+00 : f32
    %31 = vector.broadcast %cst_21 : f32 to vector<8x4xf32>
    %32 = arith.mulf %31, %30 : vector<8x4xf32>
    %cst_22 = arith.constant 0.000000e+00 : f32
    %33 = vector.broadcast %cst_22 : f32 to vector<8x128xf32>
    %c0_23 = arith.constant 0 : index
    %c0_24 = arith.constant 0 : index
    %34 = vector.load %arg9[%c0_23, %c0_24] : memref<8x128xf32, #tpu.memory_space<vmem>>, vector<8x128xf32>
    tpu.vector_store %arg9[%c0_23, %c0_24], %33 {strides = array<i32>} : memref<8x128xf32, #tpu.memory_space<vmem>>, vector<8x128xf32>,
    %c0_25 = arith.constant 0 : index
    %c0_26 = arith.constant 0 : index
    %35 = vector.load %arg9[%c0_25, %c0_26] : memref<8x128xf32, #tpu.memory_space<vmem>>, vector<8x4xf32>
    tpu.vector_store %arg9[%c0_25, %c0_26], %32 {strides = array<i32>} : memref<8x128xf32, #tpu.memory_space<vmem>>, vector<8x4xf32>,
    %36 = arith.mulf %1, %1 : vector<8x4xf32>
    %cst_27 = arith.constant -5.000000e-01 : f32
    %37 = vector.broadcast %cst_27 : f32 to vector<8x4xf32>
    %38 = arith.mulf %37, %36 : vector<8x4xf32>
    %39 = arith.subf %38, %26 : vector<8x4xf32>
    %cst_28 = arith.constant 0.918938517 : f32
    %40 = vector.broadcast %cst_28 : f32 to vector<8x4xf32>
    %41 = arith.subf %39, %40 : vector<8x4xf32>
    %42 = arith.mulf %30, %30 : vector<8x4xf32>
    %cst_29 = arith.constant 1.000000e+00 : f32
    %43 = vector.broadcast %cst_29 : f32 to vector<8x4xf32>
    %44 = arith.subf %43, %42 : vector<8x4xf32>
    %cst_30 = arith.constant 1.000000e-07 : f32
    %45 = vector.broadcast %cst_30 : f32 to vector<8x4xf32>
    %46 = arith.addf %44, %45 : vector<8x4xf32>
    %47 = math.log %46 : vector<8x4xf32>
    %48 = arith.subf %41, %47 : vector<8x4xf32>
    %cst_31 = arith.constant dense<0.000000e+00> : vector<8xf32>
    %49 = vector.multi_reduction <add>, %48, %cst_31 [1] : vector<8x4xf32> to vector<8xf32>
    %50 = vector.shape_cast %49 : vector<8xf32> to vector<8x1xf32>
    %c0_32 = arith.constant 0 : index
    %c4 = arith.constant 4 : index
    %51 = vector.load %arg9[%c0_32, %c4] : memref<8x128xf32, #tpu.memory_space<vmem>>, vector<8x1xf32>
    tpu.vector_store %arg9[%c0_32, %c4], %50 {strides = array<i32>} : memref<8x128xf32, #tpu.memory_space<vmem>>, vector<8x1xf32>,
    return
  }
  func.func @transform_0(%arg0: i32) -> (i32, i32) {
    %c0_i32 = arith.constant 0 : i32
    %c0_i32_0 = arith.constant 0 : i32
    return %arg0, %c0_i32 : i32, i32
  }
  func.func @transform_1(%arg0: i32) -> (i32, i32) {
    %c0_i32 = arith.constant 0 : i32
    %c0_i32_0 = arith.constant 0 : i32
    return %arg0, %c0_i32 : i32, i32
  }
  func.func @transform_2(%arg0: i32) -> (i32, i32) {
    %c0_i32 = arith.constant 0 : i32
    %c0_i32_0 = arith.constant 0 : i32
    %c0_i32_1 = arith.constant 0 : i32
    return %c0_i32, %c0_i32_0 : i32, i32
  }
  func.func @transform_3(%arg0: i32) -> (i32, i32) {
    %c0_i32 = arith.constant 0 : i32
    %c0_i32_0 = arith.constant 0 : i32
    %c0_i32_1 = arith.constant 0 : i32
    return %c0_i32, %c0_i32_0 : i32, i32
  }
  func.func @transform_4(%arg0: i32) -> (i32, i32) {
    %c0_i32 = arith.constant 0 : i32
    %c0_i32_0 = arith.constant 0 : i32
    %c0_i32_1 = arith.constant 0 : i32
    return %c0_i32, %c0_i32_0 : i32, i32
  }
  func.func @transform_5(%arg0: i32) -> (i32, i32) {
    %c0_i32 = arith.constant 0 : i32
    %c0_i32_0 = arith.constant 0 : i32
    %c0_i32_1 = arith.constant 0 : i32
    return %c0_i32, %c0_i32_0 : i32, i32
  }
  func.func @transform_6(%arg0: i32) -> (i32, i32) {
    %c0_i32 = arith.constant 0 : i32
    %c0_i32_0 = arith.constant 0 : i32
    %c0_i32_1 = arith.constant 0 : i32
    return %c0_i32, %c0_i32_0 : i32, i32
  }
  func.func @transform_7(%arg0: i32) -> (i32, i32) {
    %c0_i32 = arith.constant 0 : i32
    %c0_i32_0 = arith.constant 0 : i32
    %c0_i32_1 = arith.constant 0 : i32
    return %c0_i32, %c0_i32_0 : i32, i32
  }
  func.func @transform_8(%arg0: i32) -> (i32, i32) {
    %c0_i32 = arith.constant 0 : i32
    %c0_i32_0 = arith.constant 0 : i32
    return %arg0, %c0_i32 : i32, i32
  }
}

</mosaic_0001>

<llo_original>
// kernel: tpu_custom_call.1
$region0: #{tpu_custom_call.1}
  #allocation0 [shape = 'u32[]', space=smem, size = 0x4, offset = 0x4, fixed_abs, tag = 'smem constant byte address 0x4 - core index']
  #allocation1 [shape = 'u32[72,128]{1,0:T(1,128)}', space=vmem, size = 0x9000, scoped, tag = 'internal scratch']
  %s0 = inlined_call_operand.hbm [shape: f32[8,16], index: 0, kind: input, shape index: {}]
  %s1 = inlined_call_operand.vmem [shape: f32[8,4], index: 1, kind: input, shape index: {}]
  %s2 = inlined_call_operand.vmem [shape: f32[16,32], index: 2, kind: input, shape index: {}]
  %s3 = inlined_call_operand.hbm [shape: f32[1,32], index: 3, kind: input, shape index: {}]
  %s4 = inlined_call_operand.vmem [shape: f32[32,32], index: 4, kind: input, shape index: {}]
  %s5 = inlined_call_operand.hbm [shape: f32[1,32], index: 5, kind: input, shape index: {}]
  %s6 = inlined_call_operand.vmem [shape: f32[32,8], index: 6, kind: input, shape index: {}]
  %s7 = inlined_call_operand.vmem [shape: f32[1,8], index: 7, kind: input, shape index: {}]
  %s8 = inlined_call_operand.hbm [shape: f32[8,128], index: 8, kind: output, shape index: {}]
  %s9 = sld [smem:[#allocation0]]
  $region54: #{tpu_custom_call.1} parent=0
    _
  %s11 = ssub.s32 1, %s9
  %s12 = scalar_select 0, %s11, %s9
  $region1: #{tpu_custom_call.1} parent=0
    #allocation2 [shape = 'u8[4096]{0}', space=vmem, size = 0x1000, scoped, tag = 'input window, operand 0, single buffered']
    #allocation3 [shape = 's32[1]{0}', space=sflag, size = 0x4, scoped, tag = 'scoped memory for tpu_custom_call.1']
    #allocation4 [shape = 's32[1]{0}', space=sflag, size = 0x4, scoped, tag = 'scoped memory for tpu_custom_call.1']
    #allocation5 [shape = 'u8[512]{0}', space=vmem, size = 0x400, scoped, tag = 'input window, operand 3, single buffered']
    #allocation6 [shape = 's32[1]{0}', space=sflag, size = 0x4, scoped, tag = 'scoped memory for tpu_custom_call.1']
    #allocation7 [shape = 'u8[512]{0}', space=vmem, size = 0x400, scoped, tag = 'input window, operand 5, single buffered']
    #allocation8 [shape = 'u8[4096]{0}', space=vmem, size = 0x1000, scoped, tag = 'output window, operand 0, single buffered']
    %13 = vsyncpa [#allocation3], 0
    %14 = vsyncpa [#allocation6], 0
    %15 = vsyncpa [#allocation4], 0
    // Predicated region
    $region2: #{tpu_custom_call.1} parent=1 // pred_check
      _
    $region3: #{tpu_custom_call.1} parent=1 // pred_check_branch
      %17 = sbr.rel (0) target = $region5
    $region4: #{tpu_custom_call.1} parent=1 // pred_region
      %19 = vsyncadd [#allocation3], 0
      %s21 = sshll.u32 %s0, 4
      %s22 = int_to_ptr.hbm [resolvable:$true] %s21
      %s23 = sshll.u32 [#allocation2], 4
      %s24 = int_to_ptr.vmem [resolvable:$true] %s23
      %26 = dma.hbm_to_vmem [thread:$0]  %s22, 128, %s24, [#allocation3]
    $region5: #{tpu_custom_call.1} parent=1 // pred_fallthru
      _
    // Predicated region
    $region6: #{tpu_custom_call.1} parent=1 // pred_check
      _
    $region7: #{tpu_custom_call.1} parent=1 // pred_check_branch
      %28 = sbr.rel (0) target = $region9
    $region8: #{tpu_custom_call.1} parent=1 // pred_region
      _
    $region9: #{tpu_custom_call.1} parent=1 // pred_fallthru
      _
    // Predicated region
    $region10: #{tpu_custom_call.1} parent=1 // pred_check
      _
    $region11: #{tpu_custom_call.1} parent=1 // pred_check_branch
      %30 = sbr.rel (0) target = $region13
    $region12: #{tpu_custom_call.1} parent=1 // pred_region
      _
    $region13: #{tpu_custom_call.1} parent=1 // pred_fallthru
      _
    // Predicated region
    $region14: #{tpu_custom_call.1} parent=1 // pred_check
      _
    $region15: #{tpu_custom_call.1} parent=1 // pred_check_branch
      %32 = sbr.rel (0) target = $region17
    $region16: #{tpu_custom_call.1} parent=1 // pred_region
      %34 = vsyncadd [#allocation6], 0
      %s36 = sshll.u32 %s3, 4
      %s37 = int_to_ptr.hbm [resolvable:$true] %s36
      %s38 = sshll.u32 [#allocation5], 4
      %s39 = int_to_ptr.vmem [resolvable:$true] %s38
      %41 = dma.hbm_to_vmem [thread:$0]  %s37, 16, %s39, [#allocation6]
    $region17: #{tpu_custom_call.1} parent=1 // pred_fallthru
      _
    // Predicated region
    $region18: #{tpu_custom_call.1} parent=1 // pred_check
      _
    $region19: #{tpu_custom_call.1} parent=1 // pred_check_branch
      %43 = sbr.rel (0) target = $region21
    $region20: #{tpu_custom_call.1} parent=1 // pred_region
      _
    $region21: #{tpu_custom_call.1} parent=1 // pred_fallthru
      _
    // Predicated region
    $region22: #{tpu_custom_call.1} parent=1 // pred_check
      _
    $region23: #{tpu_custom_call.1} parent=1 // pred_check_branch
      %45 = sbr.rel (0) target = $region25
    $region24: #{tpu_custom_call.1} parent=1 // pred_region
      %47 = vsyncadd [#allocation6], 0
      %s49 = sshll.u32 %s5, 4
      %s50 = int_to_ptr.hbm [resolvable:$true] %s49
      %s51 = sshll.u32 [#allocation7], 4
      %s52 = int_to_ptr.vmem [resolvable:$true] %s51
      %54 = dma.hbm_to_vmem [thread:$0]  %s50, 16, %s52, [#allocation6]
    $region25: #{tpu_custom_call.1} parent=1 // pred_fallthru
      _
    // Predicated region
    $region26: #{tpu_custom_call.1} parent=1 // pred_check
      _
    $region27: #{tpu_custom_call.1} parent=1 // pred_check_branch
      %56 = sbr.rel (0) target = $region29
    $region28: #{tpu_custom_call.1} parent=1 // pred_region
      _
    $region29: #{tpu_custom_call.1} parent=1 // pred_fallthru
      _
    // Predicated region
    $region30: #{tpu_custom_call.1} parent=1 // pred_check
      _
    $region31: #{tpu_custom_call.1} parent=1 // pred_check_branch
      %58 = sbr.rel (0) target = $region33
    $region32: #{tpu_custom_call.1} parent=1 // pred_region
      _
    $region33: #{tpu_custom_call.1} parent=1 // pred_fallthru
      _
    // Predicated region
    $region34: #{tpu_custom_call.1} parent=1 // pred_check
      _
    $region35: #{tpu_custom_call.1} parent=1 // pred_check_branch
      %60 = sbr.rel (0) target = $region37
    $region36: #{tpu_custom_call.1} parent=1 // pred_region
      %62 = dma.done [#allocation3], 128
    $region37: #{tpu_custom_call.1} parent=1 // pred_fallthru
      _
    // Predicated region
    $region38: #{tpu_custom_call.1} parent=1 // pred_check
      _
    $region39: #{tpu_custom_call.1} parent=1 // pred_check_branch
      %64 = sbr.rel (0) target = $region41
    $region40: #{tpu_custom_call.1} parent=1 // pred_region
      %66 = dma.done [#allocation6], 16
    $region41: #{tpu_custom_call.1} parent=1 // pred_fallthru
      _
    // Predicated region
    $region42: #{tpu_custom_call.1} parent=1 // pred_check
      _
    $region43: #{tpu_custom_call.1} parent=1 // pred_check_branch
      %68 = sbr.rel (0) target = $region45
    $region44: #{tpu_custom_call.1} parent=1 // pred_region
      %70 = dma.done [#allocation6], 16
    $region45: #{tpu_custom_call.1} parent=1 // pred_fallthru
      _
    %v71 = vld [vmem:[#allocation2] sm:$0xff]
    %v72 = vld [vmem:[%s1] sm:$0xff]
    %v73 = vld [vmem:[%s2] sm:$0xff]
    %v74 = vld [vmem:[%s2 + $0x8] sm:$0xff]
    %v75 = vld [vmem:[#allocation5] sm:$0x1]
    %v77 = vperm.slane %v75, 0
    %vm79 = vcmask 130048
    %v81 = vsel %vm79, %v71, 0
    %83 = vmatpush.msra.mxu0 0.0
    %84 = vmatpush.msra.mxu0 0.0
    %85 = vmatpush.msra.mxu0 0.0
    %86 = vmatpush.msra.mxu0 0.0
    %87 = vmatpush.msra.mxu0 0.0
    %88 = vmatpush.msra.mxu0 0.0
    %89 = vmatpush.msra.mxu0 0.0
    %90 = vmatpush.msra.mxu0 0.0
    %91 = vmatpush.msra.mxu0 0.0
    %92 = vmatpush.msra.mxu0 0.0
    %93 = vmatpush.msra.mxu0 0.0
    %94 = vmatpush.msra.mxu0 0.0
    %95 = vmatpush.msra.mxu0 0.0
    %96 = vmatpush.msra.mxu0 0.0
    %97 = vmatpush.msra.mxu0 %v74
    %98 = vmatpush.msra.mxu0 %v73
    %99 = vmatmul.f32.gmra.mxu0 %v81
    %v100 = vpop.f32.mrf.mxu0
    %v101 = vadd.f32 %v77, %v100
    %102 = vdwg.mxu0
    %v103 = vmax.f32 %v101, 0.0
    %v104 = vld [vmem:[%s4] sm:$0xff]
    %v105 = vld [vmem:[%s4 + $0x8] sm:$0xff]
    %v106 = vld [vmem:[%s4 + $0x10] sm:$0xff]
    %v107 = vld [vmem:[%s4 + $0x18] sm:$0xff]
    %v108 = vld [vmem:[#allocation7] sm:$0x1]
    %v110 = vperm.slane %v108, 0
    %vm112 = vcmask 261120
    %v114 = vsel %vm112, %v103, 0
    %116 = vmatpush.msra.mxu0 0.0
    %117 = vmatpush.msra.mxu0 0.0
    %118 = vmatpush.msra.mxu0 0.0
    %119 = vmatpush.msra.mxu0 0.0
    %120 = vmatpush.msra.mxu0 0.0
    %121 = vmatpush.msra.mxu0 0.0
    %122 = vmatpush.msra.mxu0 0.0
    %123 = vmatpush.msra.mxu0 0.0
    %124 = vmatpush.msra.mxu0 0.0
    %125 = vmatpush.msra.mxu0 0.0
    %126 = vmatpush.msra.mxu0 0.0
    %127 = vmatpush.msra.mxu0 0.0
    %128 = vmatpush.msra.mxu0 %v107
    %129 = vmatpush.msra.mxu0 %v106
    %130 = vmatpush.msra.mxu0 %v105
    %131 = vmatpush.msra.mxu0 %v104
    %132 = vmatmul.f32.gmra.mxu0 %v114
    %v133 = vpop.f32.mrf.mxu0
    %v134 = vadd.f32 %v110, %v133
    %135 = vdwg.mxu0
    %v136 = vmax.f32 %v134, 0.0
    %v137 = vld [vmem:[%s6] sm:$0xff]
    %v138 = vld [vmem:[%s6 + $0x8] sm:$0xff]
    %v139 = vld [vmem:[%s6 + $0x10] sm:$0xff]
    %v140 = vld [vmem:[%s6 + $0x18] sm:$0xff]
    %v141 = vld [vmem:[%s7] sm:$0x1]
    %v143 = vperm.slane %v141, 0
    %v146 = vsel %vm112, %v136, 0
    %148 = vmatpush.msra.mxu0 0.0
    %149 = vmatpush.msra.mxu0 0.0
    %150 = vmatpush.msra.mxu0 0.0
    %151 = vmatpush.msra.mxu0 0.0
    %152 = vmatpush.msra.mxu0 0.0
    %153 = vmatpush.msra.mxu0 0.0
    %154 = vmatpush.msra.mxu0 0.0
    %155 = vmatpush.msra.mxu0 0.0
    %156 = vmatpush.msra.mxu0 0.0
    %157 = vmatpush.msra.mxu0 0.0
    %158 = vmatpush.msra.mxu0 0.0
    %159 = vmatpush.msra.mxu0 0.0
    %160 = vmatpush.msra.mxu0 %v140
    %161 = vmatpush.msra.mxu0 %v139
    %162 = vmatpush.msra.mxu0 %v138
    %163 = vmatpush.msra.mxu0 %v137
    %164 = vmatmul.f32.gmra.mxu0 %v146
    %v165 = vpop.f32.mrf.mxu0
    %v166 = vadd.f32 %v143, %v165
    %167 = vdwg.mxu0
    %v168 = vmax.f32 %v166, -20.0
    %v169 = vmin.f32 %v168, 2.0
    %v170 = vmul.f32 %v169, 1.442695
    %v171 = vpow.pop %v170
    %173 = vrot.lane.b32.xlu0 %v72, 4
    %v174 = vpop.permute.xlu0 %173
    %v176 = vmul.f32 %v171, %v174
    %178 = vrot.lane.b32.xlu0 %v176, 124
    %v179 = vpop.permute.xlu0 %178
    %v181 = vadd.f32 %v166, %v179
    %v182 = vtanh.pop %v181
    %v183 = vmul.f32 %v182, 2.0
    %184 = vst [vmem:[#allocation8] sm:$0xff] 0.0
    %vm185 = vcmask 31744
    %186 = vst.msk [vmem:[#allocation8] sm:$0xff] %vm185, %v183
    %v187 = vmul.f32 %v72, %v72
    %v188 = vmul.f32 %v187, -0.5
    %190 = vrot.lane.b32.xlu0 %v169, 124
    %v191 = vpop.permute.xlu0 %190
    %v193 = vsub.f32 %v188, %v191
    %v194 = vsub.f32 %v193, 0.9189385
    %v195 = vmul.f32 %v182, %v182
    %v196 = vsub.f32 1.0, %v195
    %v197 = vadd.f32 %v196, 1e-07
    %v198 = vlog2.pop %v197
    %v199 = vmul.f32 %v198, 0.6931472
    %v200 = vsub.f32 %v194, %v199
    %v201 = vsel %vm185, %v200, 0.0
    %202 = vadd.xlane.f32.xlu0 %v201
    %v203 = vpop.xlane.xlu0 %202
    %vm204 = vcmask 39968
    %205 = vst.msk [vmem:[#allocation8] sm:$0xff] %vm204, %v203
    // Predicated region
    $region46: #{tpu_custom_call.1} parent=1 // pred_check
      _
    $region47: #{tpu_custom_call.1} parent=1 // pred_check_branch
      %207 = sbr.rel (0) target = $region49
    $region48: #{tpu_custom_call.1} parent=1 // pred_region
      %209 = vsyncadd [#allocation4], 0
      %s211 = sshll.u32 [#allocation8], 4
      %s212 = int_to_ptr.vmem [resolvable:$true] %s211
      %s213 = sshll.u32 %s8, 4
      %s214 = int_to_ptr.hbm [resolvable:$true] %s213
      %216 = dma.vmem_to_hbm [thread:$0]  %s212, 128, %s214, [#allocation4]
    $region49: #{tpu_custom_call.1} parent=1 // pred_fallthru
      _
    // Predicated region
    $region50: #{tpu_custom_call.1} parent=1 // pred_check
      _
    $region51: #{tpu_custom_call.1} parent=1 // pred_check_branch
      %218 = sbr.rel (0) target = $region53
    $region52: #{tpu_custom_call.1} parent=1 // pred_region
      %220 = dma.done [#allocation4], 128
    $region53: #{tpu_custom_call.1} parent=1 // pred_fallthru
      _
    %221 = vsyncpa [#allocation3], 1
    %222 = vsyncpa [#allocation6], 1
    %223 = vsyncpa [#allocation4], 1

</llo_original>
